<compile_context>
chip_gen: v7x
topology: tpu7x:2x2x1
jax: 0.10.0
libtpu: 0.0.40
codegen_flags: <defaults>
</compile_context>

<pallas_src>
import jax
import jax.numpy as jnp
from jax.experimental import pallas as pl
from jax.experimental.pallas import tpu as pltpu

LANE = 128   # TPU lane width
SUBLANE = 8  # TPU sublane width


def _prelu(v, a):
    return jnp.where(v >= 0, v, a * v)


def mlp_kernel(slopes_ref,           # SMEM (3,) f32 : PReLU slopes a1,a2,a3
               x_ref,                # (tb, in_dim)  f32 (cast to bf16 in-kernel)
               w1s_ref, b1s_ref,     # (in_dim, 2*NP) bf16, (1, 2*NP) f32  [w1 | ws]
               w2_ref, b2_ref,       # (NP, NP) bf16, (1, NP) f32
               w3_ref, b3_ref,       # (NP, NP) bf16, (1, NP) f32
               o_ref):               # (tb, NP) out dtype
    NP = w2_ref.shape[0]             # lane-padded out width (static)
    a1 = slopes_ref[0]
    a2 = slopes_ref[1]
    a3 = slopes_ref[2]

    # Cast x to the matmul dtype on the VPU (free under MXU slack) instead of
    # paying a standalone HBM round trip for a wrapper-side cast.
    xc = x_ref[...].astype(w1s_ref.dtype)

    # Fused first layer + shortcut: one MXU pass over x, split on the lane
    # axis (split point NP is 128-aligned so both slices stay tile-aligned).
    h_all = jnp.dot(xc, w1s_ref[...], preferred_element_type=jnp.float32)
    h_all = h_all + b1s_ref[...]
    h = _prelu(h_all[:, :NP], a1)
    sc = h_all[:, NP:]               # shortcut, carried in f32 to the final add

    h = jnp.dot(h.astype(w2_ref.dtype), w2_ref[...],
                preferred_element_type=jnp.float32) + b2_ref[...]
    h = _prelu(h, a2)

    h = jnp.dot(h.astype(w3_ref.dtype), w3_ref[...],
                preferred_element_type=jnp.float32) + b3_ref[...]
    h = _prelu(h, a3)

    o_ref[...] = (h + sc).astype(o_ref.dtype)


def pack_params(p, *, compute_dtype=jnp.bfloat16):
    """Pack raw (in, out)-layout params into the fused, lane-dense layout."""
    in_dim, out_dim = p["w1"].shape
    NP = pl.cdiv(out_dim, LANE) * LANE          # lane-padded output width

    def pad_cols(a, n):
        return jnp.pad(a, ((0, 0), (0, n - a.shape[-1])))

    def pad2(a, r, c):
        return jnp.pad(a, ((0, r - a.shape[0]), (0, c - a.shape[1])))

    w1s = jnp.concatenate([pad_cols(p["w1"], NP), pad_cols(p["ws"], NP)],
                          axis=1).astype(compute_dtype)
    b1s = jnp.concatenate([pad_cols(p["b1"], NP), pad_cols(p["bs"], NP)],
                          axis=1).astype(jnp.float32)
    w2 = pad2(p["w2"], NP, NP).astype(compute_dtype)
    b2 = pad_cols(p["b2"], NP).astype(jnp.float32)
    w3 = pad2(p["w3"], NP, NP).astype(compute_dtype)
    b3 = pad_cols(p["b3"], NP).astype(jnp.float32)
    slopes = jnp.stack([p["a1"].reshape(()), p["a2"].reshape(()),
                        p["a3"].reshape(())]).astype(jnp.float32)
    return dict(w1s=w1s, b1s=b1s, w2=w2, b2=b2, w3=w3, b3=b3, slopes=slopes)


def _round_up(n, m):
    return -(-n // m) * m


def _vmem_budget_bytes():
    """Generation-aware scoped-VMEM budget (headroom left for Mosaic scratch)."""
    try:
        cap = int(pltpu.get_tpu_info().vmem_capacity_bytes)
    except Exception:
        cap = 64 * 1024 * 1024          # conservative: v7x per-TC VMEM
    return min(cap * 3 // 4, 100 * 1024 * 1024)


def _weight_bytes(in_dim, NP, w_itemsize):
    return (in_dim * 2 * NP + 2 * NP * NP) * w_itemsize + 4 * NP * 4


def _vmem_estimate(tb, in_dim, NP, w_bytes, out_itemsize):
    x_io = 2 * tb * in_dim * 4                 # f32 x tile, double-buffered
    out_io = 2 * tb * NP * out_itemsize        # output tile, double-buffered
    # rough bound on in-kernel temporaries (f32 h_all/h/sc + bf16 x/h copies)
    temps = tb * (2 * NP * 4 + 2 * NP * 4 + NP * 2 + in_dim * 2)
    return x_io + out_io + w_bytes + temps


def _pick_tb(B, in_dim, NP, w_bytes, out_itemsize, budget):
    B8 = _round_up(B, SUBLANE)
    if B8 <= 256:
        return B8                               # tiny batch: one full tile
    # Prefer MXU-friendly tiles (>=128 rows) with >=2 grid steps so the x/out
    # tiles double-buffer and both v7x TensorCores get work; cap by the VMEM
    # footprint estimate (v7x has half the VMEM of v5e/v6e).
    for cand in (512, 256, 128, 64, 32, 16, 8):
        if 2 * cand > B8:
            continue
        if _vmem_estimate(cand, in_dim, NP, w_bytes, out_itemsize) <= budget:
            return cand
    return SUBLANE


def mlp_forward(x, packed, out_dim, *, tb=None, out_dtype=jnp.float32):
    """x: (B, in_dim) f32.  packed: output of pack_params.  Returns (B, out_dim)."""
    B, in_dim = x.shape
    NP = packed["w2"].shape[0]
    assert packed["w1s"].shape == (in_dim, 2 * NP)

    w_itemsize = jnp.dtype(packed["w1s"].dtype).itemsize
    out_itemsize = jnp.dtype(out_dtype).itemsize
    w_bytes = _weight_bytes(in_dim, NP, w_itemsize)
    budget = _vmem_budget_bytes()
    if w_bytes > budget:
        # Fully-resident weights don't fit (relevant on v7x's 64 MiB per-TC
        # VMEM at large in_dim/NP); that regime needs a K-tiled first layer
        # with an "arbitrary" reduction axis instead of this layout.
        raise ValueError(
            f"weight set ({w_bytes} B) exceeds the VMEM budget ({budget} B); "
            "use a K-tiled variant for this size")

    if tb is None:
        tb = _pick_tb(B, in_dim, NP, w_bytes, out_itemsize, budget)
    assert tb % SUBLANE == 0, "batch tile must be sublane (8) aligned"

    # Pad the batch to a tile multiple instead of requiring divisibility.
    B_pad = _round_up(B, tb)
    if B_pad != B:
        x = jnp.pad(x, ((0, B_pad - B), (0, 0)))
    grid = (B_pad // tb,)

    cost = pl.CostEstimate(
        flops=2 * B_pad * (in_dim * 2 * NP + 2 * NP * NP),
        transcendentals=0,
        bytes_accessed=(B_pad * in_dim * 4          # x (f32)
                        + w_bytes                   # weights + biases
                        + B_pad * NP * out_itemsize),  # output
    )

    # Grid-invariant (constant index_map) blocks stay resident across the
    # batch grid; single-buffer them to halve their VMEM footprint.
    res = lambda shape: pl.BlockSpec(shape, lambda i: (0, 0),
                                     pipeline_mode=pl.Buffered(1))

    out_padded = pl.pallas_call(
        mlp_kernel,
        out_shape=jax.ShapeDtypeStruct((B_pad, NP), out_dtype),
        grid_spec=pltpu.PrefetchScalarGridSpec(
            num_scalar_prefetch=0,
            grid=grid,
            in_specs=[
                pl.BlockSpec(memory_space=pltpu.MemorySpace.SMEM),  # slopes (3,)
                pl.BlockSpec((tb, in_dim), lambda i: (i, 0)),       # x tile (f32)
                res((in_dim, 2 * NP)), res((1, 2 * NP)),            # w1||ws, b1||bs
                res((NP, NP)), res((1, NP)),                        # w2, b2
                res((NP, NP)), res((1, NP)),                        # w3, b3
            ],
            out_specs=pl.BlockSpec((tb, NP), lambda i: (i, 0)),
        ),
        compiler_params=pltpu.CompilerParams(
            dimension_semantics=("parallel",),
            vmem_limit_bytes=budget,
        ),
        cost_estimate=cost,
    )(packed["slopes"], x,
      packed["w1s"], packed["b1s"],
      packed["w2"], packed["b2"],
      packed["w3"], packed["b3"])

    if B_pad == B and NP == out_dim:
        return out_padded            # lane-exact and unpadded: skip the slice
    return out_padded[:B, :out_dim]


def init_params(key, in_dim, out_dim):
    ks = jax.random.split(key, 8)

    def linear(kw, kb, fan_in, fan_out):
        bound = 1.0 / jnp.sqrt(fan_in)  # PyTorch-like init bound
        w = jax.random.uniform(kw, (fan_in, fan_out), jnp.float32, -bound, bound)
        b = jax.random.uniform(kb, (1, fan_out), jnp.float32, -bound, bound)
        return w, b

    w1, b1 = linear(ks[0], ks[1], in_dim, out_dim)
    w2, b2 = linear(ks[2], ks[3], out_dim, out_dim)
    w3, b3 = linear(ks[4], ks[5], out_dim, out_dim)
    ws, bs = linear(ks[6], ks[7], in_dim, out_dim)
    # Distinct PReLU slopes (PyTorch default init is 0.25 for all three;
    # distinct values here so the test catches any slope mis-wiring).
    return dict(w1=w1, b1=b1, a1=jnp.float32(0.25),
                w2=w2, b2=b2, a2=jnp.float32(0.10),
                w3=w3, b3=b3, a3=jnp.float32(0.40),
                ws=ws, bs=bs)


def mlp_reference(x, packed, out_dim):
    """Plain-JAX reference with identical mixed-precision math to the kernel."""
    NP = packed["w2"].shape[0]
    a1, a2, a3 = packed["slopes"]
    xc = x.astype(packed["w1s"].dtype)
    h_all = jnp.dot(xc, packed["w1s"],
                    preferred_element_type=jnp.float32) + packed["b1s"]
    h = _prelu(h_all[:, :NP], a1)
    sc = h_all[:, NP:]
    h = _prelu(jnp.dot(h.astype(packed["w2"].dtype), packed["w2"],
                       preferred_element_type=jnp.float32) + packed["b2"], a2)
    h = _prelu(jnp.dot(h.astype(packed["w3"].dtype), packed["w3"],
                       preferred_element_type=jnp.float32) + packed["b3"], a3)
    return (h + sc)[:, :out_dim]


if __name__ == "__main__":
    key = jax.random.PRNGKey(0)
    kx, kp, kx2 = jax.random.split(key, 3)

    in_dim, out_dim = 16, 32
    params = init_params(kp, in_dim, out_dim)
    packed = pack_params(params, compute_dtype=jnp.bfloat16)

    # Small batch: single full-batch tile.
    B = 8
    x = jax.random.normal(kx, (B, in_dim), jnp.float32)
    out = jax.block_until_ready(mlp_forward(x, packed, out_dim))
    ref = mlp_reference(x, packed, out_dim)
    assert out.shape == (B, out_dim)
    assert jnp.allclose(out, ref, atol=1e-3, rtol=1e-3), "mismatch (B=8)"

    # Non-tile-multiple batch: exercises batch padding + multi-step grid.
    B2 = 300
    x2 = jax.random.normal(kx2, (B2, in_dim), jnp.float32)
    out2 = jax.block_until_ready(mlp_forward(x2, packed, out_dim))
    ref2 = mlp_reference(x2, packed, out_dim)
    assert out2.shape == (B2, out_dim)
    assert jnp.allclose(out2, ref2, atol=1e-3, rtol=1e-3), "mismatch (B=300)"

    print("KERNEL_OK")
</pallas_src>

<mosaic_0001>
module attributes {stable_mosaic.version = 11 : i64} {
  func.func @mlp_kernel(%arg0: i32, %arg1: memref<3xf32, #tpu.memory_space<smem>>, %arg2: memref<8x16xf32, #tpu.memory_space<vmem>>, %arg3: memref<16x256xbf16, #tpu.memory_space<vmem>>, %arg4: memref<1x256xf32, #tpu.memory_space<vmem>>, %arg5: memref<128x128xbf16, #tpu.memory_space<vmem>>, %arg6: memref<1x128xf32, #tpu.memory_space<vmem>>, %arg7: memref<128x128xbf16, #tpu.memory_space<vmem>>, %arg8: memref<1x128xf32, #tpu.memory_space<vmem>>, %arg9: memref<8x128xf32, #tpu.memory_space<vmem>>) attributes {dimension_semantics = [#tpu.dimension_semantics<parallel>], iteration_bounds = array<i64: 1>, scalar_prefetch = 0 : i64, scratch_operands = 0 : i64, tpu.core_type = #tpu.core_type<tc>, window_params = [{transform_indices = @transform_0, window_bounds = array<i64: 3>}, {transform_indices = @transform_1, window_bounds = array<i64: 8, 16>}, {pipeline_mode = #tpu.pipeline_mode<synchronous>, transform_indices = @transform_2, window_bounds = array<i64: 16, 256>}, {pipeline_mode = #tpu.pipeline_mode<synchronous>, transform_indices = @transform_3, window_bounds = array<i64: 1, 256>}, {pipeline_mode = #tpu.pipeline_mode<synchronous>, transform_indices = @transform_4, window_bounds = array<i64: 128, 128>}, {pipeline_mode = #tpu.pipeline_mode<synchronous>, transform_indices = @transform_5, window_bounds = array<i64: 1, 128>}, {pipeline_mode = #tpu.pipeline_mode<synchronous>, transform_indices = @transform_6, window_bounds = array<i64: 128, 128>}, {pipeline_mode = #tpu.pipeline_mode<synchronous>, transform_indices = @transform_7, window_bounds = array<i64: 1, 128>}, {transform_indices = @transform_8, window_bounds = array<i64: 8, 128>}]} {
    %c0 = arith.constant 0 : index
    %0 = memref.load %arg1[%c0] : memref<3xf32, #tpu.memory_space<smem>>
    %c1 = arith.constant 1 : index
    %1 = memref.load %arg1[%c1] : memref<3xf32, #tpu.memory_space<smem>>
    %c2 = arith.constant 2 : index
    %2 = memref.load %arg1[%c2] : memref<3xf32, #tpu.memory_space<smem>>
    %c0_0 = arith.constant 0 : index
    %c0_1 = arith.constant 0 : index
    %3 = vector.load %arg2[%c0_0, %c0_1] : memref<8x16xf32, #tpu.memory_space<vmem>>, vector<8x16xf32>
    %4 = arith.truncf %3 : vector<8x16xf32> to vector<8x16xbf16>
    %c0_2 = arith.constant 0 : index
    %c0_3 = arith.constant 0 : index
    %5 = vector.load %arg3[%c0_2, %c0_3] : memref<16x256xbf16, #tpu.memory_space<vmem>>, vector<16x256xbf16>
    %cst = arith.constant dense<0.000000e+00> : vector<8x256xf32>
    %6 = tpu.matmul %4, %5, %cst {dimension_numbers = #tpu.dot_dimension_numbers<[1], [0], [0], [1], [0, 0, 1, 1], [], []>} : vector<8x16xbf16>, vector<16x256xbf16>, vector<8x256xf32> -> vector<8x256xf32>
    %c0_4 = arith.constant 0 : index
    %c0_5 = arith.constant 0 : index
    %7 = vector.load %arg4[%c0_4, %c0_5] : memref<1x256xf32, #tpu.memory_space<vmem>>, vector<1x256xf32>
    %8 = vector.broadcast %7 : vector<1x256xf32> to vector<8x256xf32>
    %9 = arith.addf %6, %8 : vector<8x256xf32>
    %10 = vector.extract_strided_slice %9 {offsets = [0, 0], sizes = [8, 128], strides = [1, 1]} : vector<8x256xf32> to vector<8x128xf32>
    %cst_6 = arith.constant 0.000000e+00 : f32
    %11 = vector.broadcast %cst_6 : f32 to vector<8x128xf32>
    %12 = arith.cmpf oge, %10, %11 : vector<8x128xf32>
    %13 = vector.broadcast %0 : f32 to vector<8x128xf32>
    %14 = arith.mulf %13, %10 : vector<8x128xf32>
    %15 = arith.select %12, %10, %14 : vector<8x128xi1>, vector<8x128xf32>
    %16 = vector.extract_strided_slice %9 {offsets = [0, 128], sizes = [8, 128], strides = [1, 1]} : vector<8x256xf32> to vector<8x128xf32>
    %17 = arith.truncf %15 : vector<8x128xf32> to vector<8x128xbf16>
    %c0_7 = arith.constant 0 : index
    %c0_8 = arith.constant 0 : index
    %18 = vector.load %arg5[%c0_7, %c0_8] : memref<128x128xbf16, #tpu.memory_space<vmem>>, vector<128x128xbf16>
    %cst_9 = arith.constant dense<0.000000e+00> : vector<8x128xf32>
    %19 = tpu.matmul %17, %18, %cst_9 {dimension_numbers = #tpu.dot_dimension_numbers<[1], [0], [0], [1], [0, 0, 1, 1], [], []>} : vector<8x128xbf16>, vector<128x128xbf16>, vector<8x128xf32> -> vector<8x128xf32>
    %c0_10 = arith.constant 0 : index
    %c0_11 = arith.constant 0 : index
    %20 = vector.load %arg6[%c0_10, %c0_11] : memref<1x128xf32, #tpu.memory_space<vmem>>, vector<1x128xf32>
    %21 = vector.broadcast %20 : vector<1x128xf32> to vector<8x128xf32>
    %22 = arith.addf %19, %21 : vector<8x128xf32>
    %cst_12 = arith.constant 0.000000e+00 : f32
    %23 = vector.broadcast %cst_12 : f32 to vector<8x128xf32>
    %24 = arith.cmpf oge, %22, %23 : vector<8x128xf32>
    %25 = vector.broadcast %1 : f32 to vector<8x128xf32>
    %26 = arith.mulf %25, %22 : vector<8x128xf32>
    %27 = arith.select %24, %22, %26 : vector<8x128xi1>, vector<8x128xf32>
    %28 = arith.truncf %27 : vector<8x128xf32> to vector<8x128xbf16>
    %c0_13 = arith.constant 0 : index
    %c0_14 = arith.constant 0 : index
    %29 = vector.load %arg7[%c0_13, %c0_14] : memref<128x128xbf16, #tpu.memory_space<vmem>>, vector<128x128xbf16>
    %cst_15 = arith.constant dense<0.000000e+00> : vector<8x128xf32>
    %30 = tpu.matmul %28, %29, %cst_15 {dimension_numbers = #tpu.dot_dimension_numbers<[1], [0], [0], [1], [0, 0, 1, 1], [], []>} : vector<8x128xbf16>, vector<128x128xbf16>, vector<8x128xf32> -> vector<8x128xf32>
    %c0_16 = arith.constant 0 : index
    %c0_17 = arith.constant 0 : index
    %31 = vector.load %arg8[%c0_16, %c0_17] : memref<1x128xf32, #tpu.memory_space<vmem>>, vector<1x128xf32>
    %32 = vector.broadcast %31 : vector<1x128xf32> to vector<8x128xf32>
    %33 = arith.addf %30, %32 : vector<8x128xf32>
    %cst_18 = arith.constant 0.000000e+00 : f32
    %34 = vector.broadcast %cst_18 : f32 to vector<8x128xf32>
    %35 = arith.cmpf oge, %33, %34 : vector<8x128xf32>
    %36 = vector.broadcast %2 : f32 to vector<8x128xf32>
    %37 = arith.mulf %36, %33 : vector<8x128xf32>
    %38 = arith.select %35, %33, %37 : vector<8x128xi1>, vector<8x128xf32>
    %39 = arith.addf %38, %16 : vector<8x128xf32>
    %c0_19 = arith.constant 0 : index
    %c0_20 = arith.constant 0 : index
    %40 = vector.load %arg9[%c0_19, %c0_20] : memref<8x128xf32, #tpu.memory_space<vmem>>, vector<8x128xf32>
    tpu.vector_store %arg9[%c0_19, %c0_20], %39 {strides = array<i32>} : memref<8x128xf32, #tpu.memory_space<vmem>>, vector<8x128xf32>,
    return
  }
  func.func @transform_0(%arg0: i32) -> i32 {
    %c0_i32 = arith.constant 0 : i32
    %c0_i32_0 = arith.constant 0 : i32
    return %c0_i32 : i32
  }
  func.func @transform_1(%arg0: i32) -> (i32, i32) {
    %c0_i32 = arith.constant 0 : i32
    %c0_i32_0 = arith.constant 0 : i32
    return %arg0, %c0_i32 : i32, i32
  }
  func.func @transform_2(%arg0: i32) -> (i32, i32) {
    %c0_i32 = arith.constant 0 : i32
    %c0_i32_0 = arith.constant 0 : i32
    %c0_i32_1 = arith.constant 0 : i32
    return %c0_i32, %c0_i32_0 : i32, i32
  }
  func.func @transform_3(%arg0: i32) -> (i32, i32) {
    %c0_i32 = arith.constant 0 : i32
    %c0_i32_0 = arith.constant 0 : i32
    %c0_i32_1 = arith.constant 0 : i32
    return %c0_i32, %c0_i32_0 : i32, i32
  }
  func.func @transform_4(%arg0: i32) -> (i32, i32) {
    %c0_i32 = arith.constant 0 : i32
    %c0_i32_0 = arith.constant 0 : i32
    %c0_i32_1 = arith.constant 0 : i32
    return %c0_i32, %c0_i32_0 : i32, i32
  }
  func.func @transform_5(%arg0: i32) -> (i32, i32) {
    %c0_i32 = arith.constant 0 : i32
    %c0_i32_0 = arith.constant 0 : i32
    %c0_i32_1 = arith.constant 0 : i32
    return %c0_i32, %c0_i32_0 : i32, i32
  }
  func.func @transform_6(%arg0: i32) -> (i32, i32) {
    %c0_i32 = arith.constant 0 : i32
    %c0_i32_0 = arith.constant 0 : i32
    %c0_i32_1 = arith.constant 0 : i32
    return %c0_i32, %c0_i32_0 : i32, i32
  }
  func.func @transform_7(%arg0: i32) -> (i32, i32) {
    %c0_i32 = arith.constant 0 : i32
    %c0_i32_0 = arith.constant 0 : i32
    %c0_i32_1 = arith.constant 0 : i32
    return %c0_i32, %c0_i32_0 : i32, i32
  }
  func.func @transform_8(%arg0: i32) -> (i32, i32) {
    %c0_i32 = arith.constant 0 : i32
    %c0_i32_0 = arith.constant 0 : i32
    return %arg0, %c0_i32 : i32, i32
  }
}

</mosaic_0001>

<llo_original>
// kernel: tpu_custom_call.1
$region0: #{tpu_custom_call.1}
  #allocation0 [shape = 'u32[]', space=smem, size = 0x4, offset = 0x4, fixed_abs, tag = 'smem constant byte address 0x4 - core index']
  #allocation1 [shape = 'u32[144,128]{1,0:T(1,128)}', space=vmem, size = 0x12000, scoped, tag = 'internal scratch']
  %s0 = inlined_call_operand.hbm [shape: f32[3], index: 0, kind: input, shape index: {}]
  %s1 = inlined_call_operand.hbm [shape: f32[8,16], index: 1, kind: input, shape index: {}]
  %s2 = inlined_call_operand.hbm [shape: bf16[16,256], index: 2, kind: input, shape index: {}]
  %s3 = inlined_call_operand.vmem [shape: f32[1,256], index: 3, kind: input, shape index: {}]
  %s4 = inlined_call_operand.hbm [shape: bf16[128,128], index: 4, kind: input, shape index: {}]
  %s5 = inlined_call_operand.vmem [shape: f32[1,128], index: 5, kind: input, shape index: {}]
  %s6 = inlined_call_operand.hbm [shape: bf16[128,128], index: 6, kind: input, shape index: {}]
  %s7 = inlined_call_operand.vmem [shape: f32[1,128], index: 7, kind: input, shape index: {}]
  %s8 = inlined_call_operand.hbm [shape: f32[8,128], index: 8, kind: output, shape index: {}]
  %s9 = sld [smem:[#allocation0]]
  $region62: #{tpu_custom_call.1} parent=0
    _
  %s11 = ssub.s32 1, %s9
  %s12 = scalar_select 0, %s11, %s9
  $region1: #{tpu_custom_call.1} parent=0
    #allocation2 [shape = 'u8[512]{0}', space=smem, size = 0x200, scoped, tag = 'input window, operand 0, single buffered']
    #allocation3 [shape = 's32[1]{0}', space=sflag, size = 0x4, scoped, tag = 'scoped memory for tpu_custom_call.1']
    #allocation4 [shape = 's32[1]{0}', space=sflag, size = 0x4, scoped, tag = 'scoped memory for tpu_custom_call.1']
    #allocation5 [shape = 's32[1]{0}', space=sflag, size = 0x4, scoped, tag = 'scoped memory for tpu_custom_call.1']
    #allocation6 [shape = 'u8[4096]{0}', space=vmem, size = 0x1000, scoped, tag = 'input window, operand 1, single buffered']
    #allocation7 [shape = 'u8[8192]{0}', space=vmem, size = 0x2000, scoped, tag = 'input window, operand 2, single buffered']
    #allocation8 [shape = 's32[1]{0}', space=sflag, size = 0x4, scoped, tag = 'scoped memory for tpu_custom_call.1']
    #allocation9 [shape = 'u8[32768]{0}', space=vmem, size = 0x8000, scoped, tag = 'input window, operand 4, single buffered']
    #allocation10 [shape = 'u8[32768]{0}', space=vmem, size = 0x8000, scoped, tag = 'input window, operand 6, single buffered']
    #allocation11 [shape = 's32[1]{0}', space=sflag, size = 0x4, scoped, tag = 'scoped memory for tpu_custom_call.1']
    #allocation12 [shape = 'u8[4096]{0}', space=vmem, size = 0x1000, scoped, tag = 'output window, operand 0, single buffered']
    %13 = vsyncpa [#allocation5], 0
    %14 = vsyncpa [#allocation3], 0
    %15 = vsyncpa [#allocation8], 0
    %16 = vsyncpa [#allocation11], 0
    %17 = vsyncpa [#allocation4], 0
    // Predicated region
    $region2: #{tpu_custom_call.1} parent=1 // pred_check
      _
    $region3: #{tpu_custom_call.1} parent=1 // pred_check_branch
      %19 = sbr.rel (0) target = $region5
    $region4: #{tpu_custom_call.1} parent=1 // pred_region
      %s21 = ssub.s32 16, 16
      %22 = vsyncadd [#allocation5], %s21
      %25 = dma.hbm_to_smem %s0, 16, [#allocation2], [#allocation5]
    $region5: #{tpu_custom_call.1} parent=1 // pred_fallthru
      _
    // Predicated region
    $region6: #{tpu_custom_call.1} parent=1 // pred_check
      _
    $region7: #{tpu_custom_call.1} parent=1 // pred_check_branch
      %27 = sbr.rel (0) target = $region9
    $region8: #{tpu_custom_call.1} parent=1 // pred_region
      %s29 = ssub.s32 128, 128
      %30 = vsyncadd [#allocation3], %s29
      %s32 = sshll.u32 [#allocation6], 4
      %s33 = int_to_ptr.vmem [resolvable:$true] %s32
      %35 = dma.hbm_to_vmem [thread:$0]  %s1, 128, %s33, [#allocation3]
    $region9: #{tpu_custom_call.1} parent=1 // pred_fallthru
      _
    // Predicated region
    $region10: #{tpu_custom_call.1} parent=1 // pred_check
      _
    $region11: #{tpu_custom_call.1} parent=1 // pred_check_branch
      %37 = sbr.rel (0) target = $region13
    $region12: #{tpu_custom_call.1} parent=1 // pred_region
      %s39 = ssub.s32 256, 256
      %40 = vsyncadd [#allocation8], %s39
      %s41 = sshll.u32 [#allocation7], 4
      %s42 = int_to_ptr.vmem [resolvable:$true] %s41
      %47 = dma.hbm_to_vmem [thread:$0]  %s2, 256, %s42, [#allocation8], 128, 128, 8
    $region13: #{tpu_custom_call.1} parent=1 // pred_fallthru
      _
    // Predicated region
    $region14: #{tpu_custom_call.1} parent=1 // pred_check
      _
    $region15: #{tpu_custom_call.1} parent=1 // pred_check_branch
      %49 = sbr.rel (0) target = $region17
    $region16: #{tpu_custom_call.1} parent=1 // pred_region
      _
    $region17: #{tpu_custom_call.1} parent=1 // pred_fallthru
      _
    // Predicated region
    $region18: #{tpu_custom_call.1} parent=1 // pred_check
      _
    $region19: #{tpu_custom_call.1} parent=1 // pred_check_branch
      %51 = sbr.rel (0) target = $region21
    $region20: #{tpu_custom_call.1} parent=1 // pred_region
      %s53 = ssub.s32 1024, 1024
      %54 = vsyncadd [#allocation8], %s53
      %s55 = sshll.u32 [#allocation9], 4
      %s56 = int_to_ptr.vmem [resolvable:$true] %s55
      %61 = dma.hbm_to_vmem [thread:$0]  %s4, 1024, %s56, [#allocation8], 64, 64, 4
    $region21: #{tpu_custom_call.1} parent=1 // pred_fallthru
      _
    // Predicated region
    $region22: #{tpu_custom_call.1} parent=1 // pred_check
      _
    $region23: #{tpu_custom_call.1} parent=1 // pred_check_branch
      %63 = sbr.rel (0) target = $region25
    $region24: #{tpu_custom_call.1} parent=1 // pred_region
      _
    $region25: #{tpu_custom_call.1} parent=1 // pred_fallthru
      _
    // Predicated region
    $region26: #{tpu_custom_call.1} parent=1 // pred_check
      _
    $region27: #{tpu_custom_call.1} parent=1 // pred_check_branch
      %65 = sbr.rel (0) target = $region29
    $region28: #{tpu_custom_call.1} parent=1 // pred_region
      %s67 = ssub.s32 1024, 1024
      %68 = vsyncadd [#allocation11], %s67
      %s69 = sshll.u32 [#allocation10], 4
      %s70 = int_to_ptr.vmem [resolvable:$true] %s69
      %75 = dma.hbm_to_vmem [thread:$0]  %s6, 1024, %s70, [#allocation11], 64, 64, 4
    $region29: #{tpu_custom_call.1} parent=1 // pred_fallthru
      _
    // Predicated region
    $region30: #{tpu_custom_call.1} parent=1 // pred_check
      _
    $region31: #{tpu_custom_call.1} parent=1 // pred_check_branch
      %77 = sbr.rel (0) target = $region33
    $region32: #{tpu_custom_call.1} parent=1 // pred_region
      _
    $region33: #{tpu_custom_call.1} parent=1 // pred_fallthru
      _
    // Predicated region
    $region34: #{tpu_custom_call.1} parent=1 // pred_check
      _
    $region35: #{tpu_custom_call.1} parent=1 // pred_check_branch
      %79 = sbr.rel (0) target = $region37
    $region36: #{tpu_custom_call.1} parent=1 // pred_region
      %80 = dma.done [#allocation5], 16
    $region37: #{tpu_custom_call.1} parent=1 // pred_fallthru
      _
    // Predicated region
    $region38: #{tpu_custom_call.1} parent=1 // pred_check
      _
    $region39: #{tpu_custom_call.1} parent=1 // pred_check_branch
      %82 = sbr.rel (0) target = $region41
    $region40: #{tpu_custom_call.1} parent=1 // pred_region
      %83 = dma.done [#allocation3], 128
    $region41: #{tpu_custom_call.1} parent=1 // pred_fallthru
      _
    // Predicated region
    $region42: #{tpu_custom_call.1} parent=1 // pred_check
      _
    $region43: #{tpu_custom_call.1} parent=1 // pred_check_branch
      %85 = sbr.rel (0) target = $region45
    $region44: #{tpu_custom_call.1} parent=1 // pred_region
      %86 = dma.done [#allocation8], 256
    $region45: #{tpu_custom_call.1} parent=1 // pred_fallthru
      _
    // Predicated region
    $region46: #{tpu_custom_call.1} parent=1 // pred_check
      _
    $region47: #{tpu_custom_call.1} parent=1 // pred_check_branch
      %88 = sbr.rel (0) target = $region49
    $region48: #{tpu_custom_call.1} parent=1 // pred_region
      %89 = dma.done [#allocation8], 1024
    $region49: #{tpu_custom_call.1} parent=1 // pred_fallthru
      _
    // Predicated region
    $region50: #{tpu_custom_call.1} parent=1 // pred_check
      _
    $region51: #{tpu_custom_call.1} parent=1 // pred_check_branch
      %91 = sbr.rel (0) target = $region53
    $region52: #{tpu_custom_call.1} parent=1 // pred_region
      %92 = dma.done [#allocation11], 1024
    $region53: #{tpu_custom_call.1} parent=1 // pred_fallthru
      _
    %93 = sfence
    %s95 = sld [smem:[#allocation2]]
    %s96 = sld [smem:[#allocation2 + $0x1]]
    %s97 = sld [smem:[#allocation2 + $0x2]]
    %v98 = vld [vmem:[#allocation6] sm:$0xff]
    %v99 = vpack.c.bf16 %v98, %v98
    %v100 = vld [vmem:[#allocation7] sm:$0xff]
    %v101 = vld [vmem:[#allocation7 + $0x8] sm:$0xff]
    %v102 = vld [vmem:[%s3] sm:$0x3]
    %v104 = vlaneseq
    %v105 = vshrl.u32 %v104, 7
    %v106 = vsub.s32 0, %v105
    %v107 = vrot.slane %v102, %v106
    %v108 = vlaneseq
    %v109 = vshrl.u32 %v108, 7
    %v110 = vsub.s32 1, %v109
    %v111 = vrot.slane %v102, %v110
    %v116 = vunpack.c.l.b16 %v100
    %v117 = vunpack.c.h.b16 %v100
    %v118 = vunpack.c.l.b16 %v101
    %v119 = vunpack.c.h.b16 %v101
    %v120 = vpack.c.b16 %v118, %v116
    %v121 = vpack.c.b16 %v119, %v117
    %vm124 = vcmask 130048
    %v126 = vsel %vm124, %v99, 0
    %128 = vmatprep.subr.bf16.mxu0 %v121
    %129 = vmatpush1.bf16.msra.mxu0 %v120
    %130 = vmatprep.subr.bf16.mxu0 0
    %131 = vmatpush1.bf16.msra.mxu0 0
    %132 = vmatprep.subr.bf16.mxu0 0
    %133 = vmatpush1.bf16.msra.mxu0 0
    %134 = vmatprep.subr.bf16.mxu0 0
    %135 = vmatpush1.bf16.msra.mxu0 0
    %136 = vmatprep.subr.bf16.mxu0 0
    %137 = vmatpush1.bf16.msra.mxu0 0
    %138 = vmatprep.subr.bf16.mxu0 0
    %139 = vmatpush1.bf16.msra.mxu0 0
    %140 = vmatprep.subr.bf16.mxu0 0
    %141 = vmatpush1.bf16.msra.mxu0 0
    %142 = vmatprep.subr.bf16.mxu0 0
    %143 = vmatpush1.bf16.msra.mxu0 0
    %144 = vmatprep.subr.bf16.mxu0 0
    %145 = vmatpush1.bf16.msra.mxu0 0
    %146 = vmatprep.subr.bf16.mxu0 0
    %147 = vmatpush1.bf16.msra.mxu0 0
    %148 = vmatprep.subr.bf16.mxu0 0
    %149 = vmatpush1.bf16.msra.mxu0 0
    %150 = vmatprep.subr.bf16.mxu0 0
    %151 = vmatpush1.bf16.msra.mxu0 0
    %152 = vmatprep.subr.bf16.mxu0 0
    %153 = vmatpush1.bf16.msra.mxu0 0
    %154 = vmatprep.subr.bf16.mxu0 0
    %155 = vmatpush1.bf16.msra.mxu0 0
    %156 = vmatprep.subr.bf16.mxu0 0
    %157 = vmatpush1.bf16.msra.mxu0 0
    %158 = vmatprep.subr.bf16.mxu0 0
    %159 = vmatpush1.bf16.msra.mxu0 0
    %160 = vmatprep.mubr.bf16.mxu0 0
    %161 = vmatmul.mubr.bf16.gmra.mrb[0].mxu0 %v126
    %v162 = vpop.f32.mrb[0].mxu0
    %v163 = vadd.f32 %v107, %v162
    %v164 = vpop.f32.mrb[0].mxu0
    %v165 = vadd.f32 %v111, %v164
    %v166 = vpop.f32.mrb[0].mxu0
    %v167 = vpop.f32.mrb[0].mxu0
    %168 = vdwg.mxu0
    %vm169 = vcmp.ge.f32.partialorder %v163, 0.0
    %v170 = vstv %s95
    %v171 = vmul.f32 %v170, %v163
    %v172 = vsel %vm169, %v163, %v171
    %v173 = vpack.c.bf16 %v172, %v172
    %v174 = vld [vmem:[#allocation9] sm:$0xf]
    %v175 = vld [vmem:[#allocation9 + $0x4] sm:$0xf]
    %v176 = vld [vmem:[#allocation9 + $0x8] sm:$0xf]
    %v177 = vld [vmem:[#allocation9 + $0xc] sm:$0xf]
    %v178 = vld [vmem:[#allocation9 + $0x10] sm:$0xf]
    %v179 = vld [vmem:[#allocation9 + $0x14] sm:$0xf]
    %v180 = vld [vmem:[#allocation9 + $0x18] sm:$0xf]
    %v181 = vld [vmem:[#allocation9 + $0x1c] sm:$0xf]
    %v182 = vld [vmem:[#allocation9 + $0x20] sm:$0xf]
    %v183 = vld [vmem:[#allocation9 + $0x24] sm:$0xf]
    %v184 = vld [vmem:[#allocation9 + $0x28] sm:$0xf]
    %v185 = vld [vmem:[#allocation9 + $0x2c] sm:$0xf]
    %v186 = vld [vmem:[#allocation9 + $0x30] sm:$0xf]
    %v187 = vld [vmem:[#allocation9 + $0x34] sm:$0xf]
    %v188 = vld [vmem:[#allocation9 + $0x38] sm:$0xf]
    %v189 = vld [vmem:[#allocation9 + $0x3c] sm:$0xf]
    %v190 = vld [vmem:[%s5] sm:$0x1]
    %v192 = vlaneseq
    %v193 = vshrl.u32 %v192, 7
    %v194 = vsub.s32 0, %v193
    %v195 = vrot.slane %v190, %v194
    %v213 = vunpack.c.l.b16 %v174
    %v214 = vunpack.c.l.b16 %v175
    %v215 = vunpack.c.l.b16 %v176
    %v216 = vunpack.c.l.b16 %v177
    %v217 = vunpack.c.l.b16 %v178
    %v218 = vunpack.c.l.b16 %v179
    %v219 = vunpack.c.l.b16 %v180
    %v220 = vunpack.c.l.b16 %v181
    %v221 = vunpack.c.l.b16 %v182
    %v222 = vunpack.c.l.b16 %v183
    %v223 = vunpack.c.l.b16 %v184
    %v224 = vunpack.c.l.b16 %v185
    %v225 = vunpack.c.l.b16 %v186
    %v226 = vunpack.c.l.b16 %v187
    %v227 = vunpack.c.l.b16 %v188
    %v228 = vunpack.c.l.b16 %v189
    %v229 = vpack.c.b16 %v214, %v213
    %v230 = vpack.c.b16 %v216, %v215
    %v231 = vpack.c.b16 %v218, %v217
    %v232 = vpack.c.b16 %v220, %v219
    %v233 = vpack.c.b16 %v222, %v221
    %v234 = vpack.c.b16 %v224, %v223
    %v235 = vpack.c.b16 %v226, %v225
    %v236 = vpack.c.b16 %v228, %v227
    %245 = vmatprep.subr.bf16.mxu0 0
    %246 = vmatpush1.bf16.msra.mxu0 %v229
    %247 = vmatprep.subr.bf16.mxu0 0
    %248 = vmatpush1.bf16.msra.mxu0 %v230
    %249 = vmatprep.subr.bf16.mxu0 0
    %250 = vmatpush1.bf16.msra.mxu0 %v231
    %251 = vmatprep.subr.bf16.mxu0 0
    %252 = vmatpush1.bf16.msra.mxu0 %v232
    %253 = vmatprep.subr.bf16.mxu0 0
    %254 = vmatpush1.bf16.msra.mxu0 %v233
    %255 = vmatprep.subr.bf16.mxu0 0
    %256 = vmatpush1.bf16.msra.mxu0 %v234
    %257 = vmatprep.subr.bf16.mxu0 0
    %258 = vmatpush1.bf16.msra.mxu0 %v235
    %259 = vmatprep.subr.bf16.mxu0 0
    %260 = vmatpush1.bf16.msra.mxu0 %v236
    %261 = vmatprep.subr.bf16.mxu0 0
    %262 = vmatpush1.bf16.msra.mxu0 0
    %263 = vmatprep.subr.bf16.mxu0 0
    %264 = vmatpush1.bf16.msra.mxu0 0
    %265 = vmatprep.subr.bf16.mxu0 0
    %266 = vmatpush1.bf16.msra.mxu0 0
    %267 = vmatprep.subr.bf16.mxu0 0
    %268 = vmatpush1.bf16.msra.mxu0 0
    %269 = vmatprep.subr.bf16.mxu0 0
    %270 = vmatpush1.bf16.msra.mxu0 0
    %271 = vmatprep.subr.bf16.mxu0 0
    %272 = vmatpush1.bf16.msra.mxu0 0
    %273 = vmatprep.subr.bf16.mxu0 0
    %274 = vmatpush1.bf16.msra.mxu0 0
    %275 = vmatprep.subr.bf16.mxu0 0
    %276 = vmatpush1.bf16.msra.mxu0 0
    %277 = vmatprep.mubr.bf16.mxu0 0
    %278 = vmatmul.mubr.bf16.gmra.mrb[0].mxu0 %v173
    %v279 = vpop.f32.mrb[0].mxu0
    %v280 = vadd.f32 %v195, %v279
    %v281 = vpop.f32.mrb[0].mxu0
    %v282 = vpop.f32.mrb[0].mxu0
    %v283 = vpop.f32.mrb[0].mxu0
    %284 = vdwg.mxu0
    %vm285 = vcmp.ge.f32.partialorder %v280, 0.0
    %v286 = vstv %s96
    %v287 = vmul.f32 %v286, %v280
    %v288 = vsel %vm285, %v280, %v287
    %v289 = vpack.c.bf16 %v288, %v288
    %v290 = vld [vmem:[#allocation10] sm:$0xf]
    %v291 = vld [vmem:[#allocation10 + $0x4] sm:$0xf]
    %v292 = vld [vmem:[#allocation10 + $0x8] sm:$0xf]
    %v293 = vld [vmem:[#allocation10 + $0xc] sm:$0xf]
    %v294 = vld [vmem:[#allocation10 + $0x10] sm:$0xf]
    %v295 = vld [vmem:[#allocation10 + $0x14] sm:$0xf]
    %v296 = vld [vmem:[#allocation10 + $0x18] sm:$0xf]
    %v297 = vld [vmem:[#allocation10 + $0x1c] sm:$0xf]
    %v298 = vld [vmem:[#allocation10 + $0x20] sm:$0xf]
    %v299 = vld [vmem:[#allocation10 + $0x24] sm:$0xf]
    %v300 = vld [vmem:[#allocation10 + $0x28] sm:$0xf]
    %v301 = vld [vmem:[#allocation10 + $0x2c] sm:$0xf]
    %v302 = vld [vmem:[#allocation10 + $0x30] sm:$0xf]
    %v303 = vld [vmem:[#allocation10 + $0x34] sm:$0xf]
    %v304 = vld [vmem:[#allocation10 + $0x38] sm:$0xf]
    %v305 = vld [vmem:[#allocation10 + $0x3c] sm:$0xf]
    %v306 = vld [vmem:[%s7] sm:$0x1]
    %v308 = vlaneseq
    %v309 = vshrl.u32 %v308, 7
    %v310 = vsub.s32 0, %v309
    %v311 = vrot.slane %v306, %v310
    %v329 = vunpack.c.l.b16 %v290
    %v330 = vunpack.c.l.b16 %v291
    %v331 = vunpack.c.l.b16 %v292
    %v332 = vunpack.c.l.b16 %v293
    %v333 = vunpack.c.l.b16 %v294
    %v334 = vunpack.c.l.b16 %v295
    %v335 = vunpack.c.l.b16 %v296
    %v336 = vunpack.c.l.b16 %v297
    %v337 = vunpack.c.l.b16 %v298
    %v338 = vunpack.c.l.b16 %v299
    %v339 = vunpack.c.l.b16 %v300
    %v340 = vunpack.c.l.b16 %v301
    %v341 = vunpack.c.l.b16 %v302
    %v342 = vunpack.c.l.b16 %v303
    %v343 = vunpack.c.l.b16 %v304
    %v344 = vunpack.c.l.b16 %v305
    %v345 = vpack.c.b16 %v330, %v329
    %v346 = vpack.c.b16 %v332, %v331
    %v347 = vpack.c.b16 %v334, %v333
    %v348 = vpack.c.b16 %v336, %v335
    %v349 = vpack.c.b16 %v338, %v337
    %v350 = vpack.c.b16 %v340, %v339
    %v351 = vpack.c.b16 %v342, %v341
    %v352 = vpack.c.b16 %v344, %v343
    %361 = vmatprep.subr.bf16.mxu0 0
    %362 = vmatpush1.bf16.msra.mxu0 %v345
    %363 = vmatprep.subr.bf16.mxu0 0
    %364 = vmatpush1.bf16.msra.mxu0 %v346
    %365 = vmatprep.subr.bf16.mxu0 0
    %366 = vmatpush1.bf16.msra.mxu0 %v347
    %367 = vmatprep.subr.bf16.mxu0 0
    %368 = vmatpush1.bf16.msra.mxu0 %v348
    %369 = vmatprep.subr.bf16.mxu0 0
    %370 = vmatpush1.bf16.msra.mxu0 %v349
    %371 = vmatprep.subr.bf16.mxu0 0
    %372 = vmatpush1.bf16.msra.mxu0 %v350
    %373 = vmatprep.subr.bf16.mxu0 0
    %374 = vmatpush1.bf16.msra.mxu0 %v351
    %375 = vmatprep.subr.bf16.mxu0 0
    %376 = vmatpush1.bf16.msra.mxu0 %v352
    %377 = vmatprep.subr.bf16.mxu0 0
    %378 = vmatpush1.bf16.msra.mxu0 0
    %379 = vmatprep.subr.bf16.mxu0 0
    %380 = vmatpush1.bf16.msra.mxu0 0
    %381 = vmatprep.subr.bf16.mxu0 0
    %382 = vmatpush1.bf16.msra.mxu0 0
    %383 = vmatprep.subr.bf16.mxu0 0
    %384 = vmatpush1.bf16.msra.mxu0 0
    %385 = vmatprep.subr.bf16.mxu0 0
    %386 = vmatpush1.bf16.msra.mxu0 0
    %387 = vmatprep.subr.bf16.mxu0 0
    %388 = vmatpush1.bf16.msra.mxu0 0
    %389 = vmatprep.subr.bf16.mxu0 0
    %390 = vmatpush1.bf16.msra.mxu0 0
    %391 = vmatprep.subr.bf16.mxu0 0
    %392 = vmatpush1.bf16.msra.mxu0 0
    %393 = vmatprep.mubr.bf16.mxu0 0
    %394 = vmatmul.mubr.bf16.gmra.mrb[0].mxu0 %v289
    %v395 = vpop.f32.mrb[0].mxu0
    %v396 = vadd.f32 %v311, %v395
    %v397 = vpop.f32.mrb[0].mxu0
    %v398 = vpop.f32.mrb[0].mxu0
    %v399 = vpop.f32.mrb[0].mxu0
    %400 = vdwg.mxu0
    %vm401 = vcmp.ge.f32.partialorder %v396, 0.0
    %v402 = vstv %s97
    %v403 = vmul.f32 %v402, %v396
    %v404 = vsel %vm401, %v396, %v403
    %v405 = vadd.f32 %v404, %v165
    %406 = vst [vmem:[#allocation12] sm:$0xff] %v405
    // Predicated region
    $region54: #{tpu_custom_call.1} parent=1 // pred_check
      _
    $region55: #{tpu_custom_call.1} parent=1 // pred_check_branch
      %408 = sbr.rel (0) target = $region57
    $region56: #{tpu_custom_call.1} parent=1 // pred_region
      %s410 = ssub.s32 128, 128
      %411 = vsyncadd [#allocation4], %s410
      %s413 = sshll.u32 [#allocation12], 4
      %s414 = int_to_ptr.vmem [resolvable:$true] %s413
      %416 = dma.vmem_to_hbm [thread:$0]  %s414, 128, %s8, [#allocation4]
    $region57: #{tpu_custom_call.1} parent=1 // pred_fallthru
      _
    // Predicated region
    $region58: #{tpu_custom_call.1} parent=1 // pred_check
      _
    $region59: #{tpu_custom_call.1} parent=1 // pred_check_branch
      %418 = sbr.rel (0) target = $region61
    $region60: #{tpu_custom_call.1} parent=1 // pred_region
      %419 = dma.done [#allocation4], 128
    $region61: #{tpu_custom_call.1} parent=1 // pred_fallthru
      _
    %420 = vsyncpa [#allocation3], 1
    %421 = vsyncpa [#allocation8], 1
    %422 = vsyncpa [#allocation11], 1
    %423 = vsyncpa [#allocation4], 1
    %424 = vsyncpa [#allocation5], 1

</llo_original>
